<compile_context>
chip_gen: v6e
topology: v6e:2x2x1
jax: 0.10.0
libtpu: 0.0.40
codegen_flags: <defaults>
</compile_context>

<pallas_src>
import functools

import jax
import jax.numpy as jnp
from jax.experimental import pallas as pl
from jax.experimental.pallas import tpu as pltpu


def _soft_xent_kernel(x_ref, t_ref, o_ref, *, n_rows: int, targets_normalized: bool):
    i = pl.program_id(0)
    tn = x_ref.shape[0]

    x = x_ref[...].astype(jnp.float32)           # (tn, C)
    t = t_ref[...].astype(jnp.float32)           # (tn, C)

    # Fused, numerically stable soft cross-entropy (no (tn,C) logp intermediate):
    #   sum_c -t * log_softmax(x) = (m + lse) * sum_c(t) - sum_c(t * x)
    m = jnp.max(x, axis=-1, keepdims=True)                          # (tn, 1)
    lse = jnp.log(jnp.sum(jnp.exp(x - m), axis=-1, keepdims=True))  # (tn, 1)
    tx_sum = jnp.sum(t * x, axis=-1, keepdims=True)                 # (tn, 1)
    if targets_normalized:
        contrib = (m + lse) - tx_sum
    else:
        t_sum = jnp.sum(t, axis=-1, keepdims=True)                  # (tn, 1)
        contrib = (m + lse) * t_sum - tx_sum

    # Mask only the (tn, 1) per-row contribution (padded rows of the last tile
    # may contain garbage; the where-select discards any NaN/Inf they produce).
    row_ids = i * tn + jax.lax.broadcasted_iota(jnp.int32, (tn, 1), 0)
    o_ref[...] = jnp.where(row_ids < n_rows, contrib, 0.0)


def soft_target_cross_entropy(
    x: jax.Array,
    target: jax.Array,
    *,
    targets_normalized: bool = False,
    rows_per_tile: int | None = None,
) -> jax.Array:
    """Pallas implementation of timm's SoftTargetCrossEntropy forward."""
    assert x.shape == target.shape and x.ndim == 2
    n, c = x.shape

    # Per-generation VMEM capacity (v5e/v6e: 128 MiB, v7x: 64 MiB per TC).
    try:
        vmem_cap = int(pltpu.get_tpu_info().vmem_capacity_bytes)
    except Exception:  # pragma: no cover - conservative fallback
        vmem_cap = 64 * 1024 * 1024

    # Raise the scoped VMEM limit, leaving headroom below physical capacity.
    vmem_limit = int(min(vmem_cap * 3 // 4, 96 * 1024 * 1024))

    if rows_per_tile is None:
        # Row-tile sizing against ~half the limit:
        #   2 inputs x 2 pipeline buffers x (tn, C) in storage dtype
        # + ~4 f32 (tn, C) in-kernel temporaries (x/t casts, exp(x-m), t*x).
        itemsize = max(x.dtype.itemsize, target.dtype.itemsize)
        bytes_per_row = 2 * 2 * c * itemsize + 4 * c * 4
        budget = vmem_limit // 2
        tn_cap = 512 if vmem_cap <= 64 * 1024 * 1024 else 1024
        tn = (budget // bytes_per_row) // 8 * 8
        tn = max(8, min(tn, tn_cap, ((n + 7) // 8) * 8))
    else:
        tn = max(8, (rows_per_tile // 8) * 8)
    # TODO(synk): for vocab-scale C (>= ~32k) add a class-axis grid dimension with
    # an online logsumexp so tn does not collapse toward 8 rows.
    # TODO(synk): for tiny C (< 128) lanes are underutilized; if that workload is
    # real, fold k rows into the lane axis in the wrapper and do segmented sums.

    num_tiles = pl.cdiv(n, tn)
    kernel = functools.partial(
        _soft_xent_kernel, n_rows=n, targets_normalized=targets_normalized
    )

    cost = pl.CostEstimate(
        flops=8 * n * c,
        transcendentals=n * c,
        bytes_accessed=n * c * (x.dtype.itemsize + target.dtype.itemsize)
        + num_tiles * tn * 4,
    )

    per_row = pl.pallas_call(
        kernel,
        out_shape=jax.ShapeDtypeStruct((num_tiles * tn, 1), jnp.float32),
        grid_spec=pltpu.PrefetchScalarGridSpec(
            num_scalar_prefetch=0,
            grid=(num_tiles,),
            in_specs=[
                pl.BlockSpec((tn, c), lambda i: (i, 0)),
                pl.BlockSpec((tn, c), lambda i: (i, 0)),
            ],
            out_specs=pl.BlockSpec((tn, 1), lambda i: (i, 0)),
        ),
        compiler_params=pltpu.CompilerParams(
            dimension_semantics=("parallel",),  # independent per-tile partials
            vmem_limit_bytes=vmem_limit,
        ),
        cost_estimate=cost,
    )(x, target)

    # Tiny final reduction over the per-row losses (padded rows are exactly 0).
    return jnp.sum(per_row) * jnp.float32(1.0 / n)


if __name__ == "__main__":
    key = jax.random.PRNGKey(0)
    kx, kt, kx2, kt2 = jax.random.split(key, 4)

    def _ref(x, t):
        return jnp.mean(jnp.sum(-t * jax.nn.log_softmax(x, axis=-1), axis=-1))

    # Case 1: non-multiple-of-8 N exercises the cdiv + row-masking path.
    N, C = 10, 32
    x = jax.random.normal(kx, (N, C), dtype=jnp.float32)
    target = jax.nn.softmax(jax.random.normal(kt, (N, C), dtype=jnp.float32), axis=-1)
    loss = jax.block_until_ready(soft_target_cross_entropy(x, target))
    ref = _ref(x, target)
    assert jnp.allclose(loss, ref, rtol=1e-5, atol=1e-5), (loss, ref)

    # Case 2: small forced tile -> multiple parallel grid steps (per-tile partials).
    N2, C2 = 40, 64
    x2 = jax.random.normal(kx2, (N2, C2), dtype=jnp.float32)
    target2 = jax.nn.softmax(jax.random.normal(kt2, (N2, C2), dtype=jnp.float32), axis=-1)
    loss2 = jax.block_until_ready(
        soft_target_cross_entropy(x2, target2, rows_per_tile=8)
    )
    ref2 = _ref(x2, target2)
    assert jnp.allclose(loss2, ref2, rtol=1e-5, atol=1e-5), (loss2, ref2)

    print("KERNEL_OK")
</pallas_src>

<mosaic_0001>
module attributes {stable_mosaic.version = 11 : i64} {
  func.func @_soft_xent_kernel(%arg0: i32, %arg1: memref<16x32xf32, #tpu.memory_space<vmem>>, %arg2: memref<16x32xf32, #tpu.memory_space<vmem>>, %arg3: memref<16x1xf32, #tpu.memory_space<vmem>>) attributes {dimension_semantics = [#tpu.dimension_semantics<parallel>], iteration_bounds = array<i64: 1>, scalar_prefetch = 0 : i64, scratch_operands = 0 : i64, tpu.core_type = #tpu.core_type<tc>, window_params = [{transform_indices = @transform_0, window_bounds = array<i64: 16, 32>}, {transform_indices = @transform_1, window_bounds = array<i64: 16, 32>}, {transform_indices = @transform_2, window_bounds = array<i64: 16, 1>}]} {
    %c0 = arith.constant 0 : index
    %c0_0 = arith.constant 0 : index
    %0 = vector.load %arg1[%c0, %c0_0] : memref<16x32xf32, #tpu.memory_space<vmem>>, vector<16x32xf32>
    %c0_1 = arith.constant 0 : index
    %c0_2 = arith.constant 0 : index
    %1 = vector.load %arg2[%c0_1, %c0_2] : memref<16x32xf32, #tpu.memory_space<vmem>>, vector<16x32xf32>
    %cst = arith.constant dense<0xFF800000> : vector<16xf32>
    %2 = vector.multi_reduction <maximumf>, %0, %cst [1] : vector<16x32xf32> to vector<16xf32>
    %3 = vector.shape_cast %2 : vector<16xf32> to vector<16x1xf32>
    %4 = vector.broadcast %3 : vector<16x1xf32> to vector<16x32xf32>
    %5 = arith.subf %0, %4 : vector<16x32xf32>
    %6 = math.exp %5 : vector<16x32xf32>
    %cst_3 = arith.constant dense<0.000000e+00> : vector<16xf32>
    %7 = vector.multi_reduction <add>, %6, %cst_3 [1] : vector<16x32xf32> to vector<16xf32>
    %8 = vector.shape_cast %7 : vector<16xf32> to vector<16x1xf32>
    %9 = math.log %8 : vector<16x1xf32>
    %10 = arith.mulf %1, %0 : vector<16x32xf32>
    %cst_4 = arith.constant dense<0.000000e+00> : vector<16xf32>
    %11 = vector.multi_reduction <add>, %10, %cst_4 [1] : vector<16x32xf32> to vector<16xf32>
    %12 = vector.shape_cast %11 : vector<16xf32> to vector<16x1xf32>
    %cst_5 = arith.constant dense<0.000000e+00> : vector<16xf32>
    %13 = vector.multi_reduction <add>, %1, %cst_5 [1] : vector<16x32xf32> to vector<16xf32>
    %14 = vector.shape_cast %13 : vector<16xf32> to vector<16x1xf32>
    %15 = arith.addf %3, %9 : vector<16x1xf32>
    %16 = arith.mulf %15, %14 : vector<16x1xf32>
    %17 = arith.subf %16, %12 : vector<16x1xf32>
    %c16_i32 = arith.constant 16 : i32
    %18 = arith.muli %arg0, %c16_i32 : i32
    %19 = tpu.iota {dimensions = array<i32: 0>} : vector<16x1xi32>
    %20 = vector.broadcast %18 : i32 to vector<16x1xi32>
    %21 = arith.addi %20, %19 : vector<16x1xi32>
    %c10_i32 = arith.constant 10 : i32
    %22 = vector.broadcast %c10_i32 : i32 to vector<16x1xi32>
    %23 = arith.cmpi slt, %21, %22 : vector<16x1xi32>
    %cst_6 = arith.constant 0.000000e+00 : f32
    %24 = vector.broadcast %cst_6 : f32 to vector<16x1xf32>
    %25 = arith.select %23, %17, %24 : vector<16x1xi1>, vector<16x1xf32>
    %c0_7 = arith.constant 0 : index
    %c0_8 = arith.constant 0 : index
    %26 = vector.load %arg3[%c0_7, %c0_8] : memref<16x1xf32, #tpu.memory_space<vmem>>, vector<16x1xf32>
    tpu.vector_store %arg3[%c0_7, %c0_8], %25 {strides = array<i32>} : memref<16x1xf32, #tpu.memory_space<vmem>>, vector<16x1xf32>,
    return
  }
  func.func @transform_0(%arg0: i32) -> (i32, i32) {
    %c0_i32 = arith.constant 0 : i32
    %c0_i32_0 = arith.constant 0 : i32
    return %arg0, %c0_i32 : i32, i32
  }
  func.func @transform_1(%arg0: i32) -> (i32, i32) {
    %c0_i32 = arith.constant 0 : i32
    %c0_i32_0 = arith.constant 0 : i32
    return %arg0, %c0_i32 : i32, i32
  }
  func.func @transform_2(%arg0: i32) -> (i32, i32) {
    %c0_i32 = arith.constant 0 : i32
    %c0_i32_0 = arith.constant 0 : i32
    return %arg0, %c0_i32 : i32, i32
  }
}

</mosaic_0001>

<llo_original>
// kernel: tpu_custom_call.1
$region0: #{tpu_custom_call.1}
  #allocation0 [shape = 'u32[]', space=smem, size = 0x4, offset = 0x4, fixed_abs, tag = 'smem constant byte address 0x4 - core index']
  #allocation1 [shape = 'u32[144,128]{1,0:T(1,128)}', space=vmem, size = 0x12000, scoped, tag = 'internal scratch']
  %s0 = inlined_call_operand.hbm [shape: f32[10,32], index: 0, kind: input, shape index: {}]
  %s1 = inlined_call_operand.hbm [shape: f32[10,32], index: 1, kind: input, shape index: {}]
  %s2 = inlined_call_operand.vmem [shape: f32[16,1], index: 2, kind: output, shape index: {}]
  %s3 = sld [smem:[#allocation0]]
  $region26: #{tpu_custom_call.1} parent=0
    _
  %s5 = ssub.s32 1, %s3
  %s6 = scalar_select 0, %s5, %s3
  $region1: #{tpu_custom_call.1} parent=0
    #allocation2 [shape = 'u8[8192]{0}', space=vmem, size = 0x2000, scoped, tag = 'input window, operand 0, single buffered']
    #allocation3 [shape = 's32[1]{0}', space=sflag, size = 0x4, scoped, tag = 'scoped memory for tpu_custom_call.1']
    #allocation4 [shape = 'u8[8192]{0}', space=vmem, size = 0x2000, scoped, tag = 'input window, operand 1, single buffered']
    #allocation5 [shape = 's32[1]{0}', space=sflag, size = 0x4, scoped, tag = 'scoped memory for tpu_custom_call.1']
    %7 = vsyncpa [#allocation3], 0
    %8 = vsyncpa [#allocation5], 0
    // Predicated region
    $region2: #{tpu_custom_call.1} parent=1 // pred_check
      _
    $region3: #{tpu_custom_call.1} parent=1 // pred_check_branch
      %10 = sbr.rel (0) target = $region5
    $region4: #{tpu_custom_call.1} parent=1 // pred_region
      %s12 = ssub.s32 256, 256
      %13 = vsyncadd [#allocation3], %s12
      %s14 = sshll.u32 [#allocation2], 4
      %s15 = int_to_ptr.vmem [resolvable:$true] %s14
      %20 = dma.hbm_to_vmem [thread:$0]  %s0, 256, %s15, [#allocation3], 128, 128, 8
    $region5: #{tpu_custom_call.1} parent=1 // pred_fallthru
      _
    // Predicated region
    $region6: #{tpu_custom_call.1} parent=1 // pred_check
      _
    $region7: #{tpu_custom_call.1} parent=1 // pred_check_branch
      %22 = sbr.rel (0) target = $region9
    $region8: #{tpu_custom_call.1} parent=1 // pred_region
      %s24 = ssub.s32 256, 256
      %25 = vsyncadd [#allocation5], %s24
      %s26 = sshll.u32 [#allocation4], 4
      %s27 = int_to_ptr.vmem [resolvable:$true] %s26
      %32 = dma.hbm_to_vmem [thread:$0]  %s1, 256, %s27, [#allocation5], 128, 128, 8
    $region9: #{tpu_custom_call.1} parent=1 // pred_fallthru
      _
    // Predicated region
    $region10: #{tpu_custom_call.1} parent=1 // pred_check
      _
    $region11: #{tpu_custom_call.1} parent=1 // pred_check_branch
      %34 = sbr.rel (0) target = $region13
    $region12: #{tpu_custom_call.1} parent=1 // pred_region
      %35 = dma.done [#allocation3], 256
    $region13: #{tpu_custom_call.1} parent=1 // pred_fallthru
      _
    // Predicated region
    $region14: #{tpu_custom_call.1} parent=1 // pred_check
      _
    $region15: #{tpu_custom_call.1} parent=1 // pred_check_branch
      %37 = sbr.rel (0) target = $region17
    $region16: #{tpu_custom_call.1} parent=1 // pred_region
      %38 = dma.done [#allocation5], 256
    $region17: #{tpu_custom_call.1} parent=1 // pred_fallthru
      _
    %v39 = vld [vmem:[#allocation2] sm:$0xff]
    %v40 = vld [vmem:[#allocation2 + $0x8] sm:$0xff]
    %v41 = vld [vmem:[#allocation4] sm:$0xff]
    %v42 = vld [vmem:[#allocation4 + $0x8] sm:$0xff]
    %vm43 = vcmask 261120
    %v44 = vsel %vm43, %v39, -inf
    %45 = vmax.xlane.f32.xlu0 %v44
    %v46 = vpop.xlane.xlu0 %45
    %v47 = vsel %vm43, %v40, -inf
    %48 = vmax.xlane.f32.xlu0 %v47
    %v49 = vpop.xlane.xlu0 %48
    %v50 = vsub.f32 %v39, %v46
    %v51 = vsub.f32 %v40, %v49
    %v52 = vmul.f32 %v50, 1.442695
    %v53 = vpow.pop %v52
    %v54 = vmul.f32 %v51, 1.442695
    %v55 = vpow.pop %v54
    %v56 = vsel %vm43, %v53, 0.0
    %57 = vadd.xlane.f32.xlu0 %v56
    %v58 = vpop.xlane.xlu0 %57
    %v59 = vsel %vm43, %v55, 0.0
    %60 = vadd.xlane.f32.xlu0 %v59
    %v61 = vpop.xlane.xlu0 %60
    %v62 = vlog2.pop %v58
    %v63 = vmul.f32 %v62, 0.6931472
    %v64 = vlog2.pop %v61
    %v65 = vmul.f32 %v64, 0.6931472
    %v66 = vmul.f32 %v41, %v39
    %v67 = vmul.f32 %v42, %v40
    %v68 = vsel %vm43, %v66, 0.0
    %69 = vadd.xlane.f32.xlu0 %v68
    %v70 = vpop.xlane.xlu0 %69
    %v71 = vsel %vm43, %v67, 0.0
    %72 = vadd.xlane.f32.xlu0 %v71
    %v73 = vpop.xlane.xlu0 %72
    %v74 = vsel %vm43, %v41, 0.0
    %75 = vadd.xlane.f32.xlu0 %v74
    %v76 = vpop.xlane.xlu0 %75
    %v77 = vsel %vm43, %v42, 0.0
    %78 = vadd.xlane.f32.xlu0 %v77
    %v79 = vpop.xlane.xlu0 %78
    %v80 = vadd.f32 %v46, %v63
    %v81 = vadd.f32 %v49, %v65
    %v82 = vmul.f32 %v80, %v76
    %v83 = vmul.f32 %v81, %v79
    %v84 = vsub.f32 %v82, %v70
    %v85 = vsub.f32 %v83, %v73
    %s86 = smul.u32 0, 16
    %v87 = vlaneseq
    %v88 = vshrl.u32 %v87, 7
    %v89 = vadd.s32 %v88, 8
    %v90 = vstv %s86
    %v91 = vadd.s32 %v90, %v88
    %v92 = vadd.s32 %v90, %v89
    %vm93 = vcmp.lt.s32.totalorder %v91, 10
    %vm94 = vcmp.lt.s32.totalorder %v92, 10
    %v95 = vsel %vm93, %v84, 0.0
    %v96 = vsel %vm94, %v85, 0.0
    %vm97 = vcmask 7168
    %98 = vst.msk [vmem:[%s2] sm:$0xff] %vm97, %v95
    %99 = vst.msk [vmem:[%s2 + $0x8] sm:$0xff] %vm97, %v96
    // Predicated region
    $region18: #{tpu_custom_call.1} parent=1 // pred_check
      _
    $region19: #{tpu_custom_call.1} parent=1 // pred_check_branch
      %101 = sbr.rel (0) target = $region21
    $region20: #{tpu_custom_call.1} parent=1 // pred_region
      _
    $region21: #{tpu_custom_call.1} parent=1 // pred_fallthru
      _
    // Predicated region
    $region22: #{tpu_custom_call.1} parent=1 // pred_check
      _
    $region23: #{tpu_custom_call.1} parent=1 // pred_check_branch
      %103 = sbr.rel (0) target = $region25
    $region24: #{tpu_custom_call.1} parent=1 // pred_region
      _
    $region25: #{tpu_custom_call.1} parent=1 // pred_fallthru
      _
    %104 = vsyncpa [#allocation3], 1
    %105 = vsyncpa [#allocation5], 1

</llo_original>
